<compile_context>
chip_gen: v7x
topology: tpu7x:2x2x1
jax: 0.10.0
libtpu: 0.0.40
codegen_flags: <defaults>
</compile_context>

<pallas_src>
import jax
import jax.numpy as jnp
from jax.experimental import pallas as pl
from jax.experimental.pallas import tpu as pltpu


def _round_up(n, m):
    return ((n + m - 1) // m) * m


def mlp_kernel(x_ref, w2_ref, b2_ref, w3_ref, b3_ref, o_ref):
    # fc2: (TB, 120) @ (120, 128) + (1, 128) -> relu   (cols 84..127 are 0)
    h = jnp.dot(x_ref[...], w2_ref[...], preferred_element_type=jnp.float32)
    h = jnp.maximum(h + b2_ref[...], 0.0)
    # fc3: (TB, 128) @ (128, 128) + (1, 128)           (cols 10..127 are 0)
    out = jnp.dot(h, w3_ref[...], preferred_element_type=jnp.float32)
    o_ref[...] = (out + b3_ref[...]).astype(o_ref.dtype)


def f2_forward(x, w2p, b2p, w3p, b3p, *, block_b=512):
    """x: (B, 120) f32; padded params from pad_params(). Returns (B, 10)."""
    B, K = x.shape                 # K = 120
    P = w2p.shape[1]               # 128 (lane-padded hidden / output width)

    # Batch tiling: weights stay VMEM-resident across grid steps.
    TB = min(block_b, _round_up(B, 8))
    B_pad = _round_up(B, TB)
    if B_pad != B:
        x = jnp.pad(x, ((0, B_pad - B), (0, 0)))
    grid = (B_pad // TB,)

    flops = 2 * B_pad * (K * P + P * P)
    bytes_accessed = 4 * (B_pad * K + K * P + P + P * P + P + B_pad * P)

    out_padded = pl.pallas_call(
        mlp_kernel,
        out_shape=jax.ShapeDtypeStruct((B_pad, P), x.dtype),
        grid=grid,
        in_specs=[
            pl.BlockSpec((TB, K), lambda i: (i, 0)),   # x tile per grid step
            pl.BlockSpec((K, P), lambda i: (0, 0)),    # w2 pinned in VMEM
            pl.BlockSpec((1, P), lambda i: (0, 0)),    # b2 pinned
            pl.BlockSpec((P, P), lambda i: (0, 0)),    # w3 pinned
            pl.BlockSpec((1, P), lambda i: (0, 0)),    # b3 pinned
        ],
        out_specs=pl.BlockSpec((TB, P), lambda i: (i, 0)),
        compiler_params=pltpu.CompilerParams(
            dimension_semantics=("parallel",),
        ),
        cost_estimate=pl.CostEstimate(
            flops=flops, transcendentals=0, bytes_accessed=bytes_accessed),
    )(x, w2p, b2p, w3p, b3p)

    return out_padded[:B, :10]


def init_params(key):
    # Mimic PyTorch nn.Linear default init: U(-1/sqrt(fan_in), 1/sqrt(fan_in)).
    # Weights stored as (in, out) == transpose of PyTorch's (out, in).
    k1, k2, k3, k4 = jax.random.split(key, 4)
    bound2 = 1.0 / jnp.sqrt(120.0)
    bound3 = 1.0 / jnp.sqrt(84.0)
    w2 = jax.random.uniform(k1, (120, 84), jnp.float32, -bound2, bound2)
    b2 = jax.random.uniform(k2, (84,), jnp.float32, -bound2, bound2)
    w3 = jax.random.uniform(k3, (84, 10), jnp.float32, -bound3, bound3)
    b3 = jax.random.uniform(k4, (10,), jnp.float32, -bound3, bound3)
    return w2, b2, w3, b3


def pad_params(w2, b2, w3, b3, lane=128):
    """One-time zero-padding of feature dims to lane width (numerical no-op)."""
    H = lane   # padded hidden width
    O = lane   # padded output width
    w2p = jnp.zeros((w2.shape[0], H), w2.dtype).at[:, : w2.shape[1]].set(w2)
    b2p = jnp.zeros((1, H), b2.dtype).at[0, : b2.shape[0]].set(b2)
    w3p = jnp.zeros((H, O), w3.dtype).at[: w3.shape[0], : w3.shape[1]].set(w3)
    b3p = jnp.zeros((1, O), b3.dtype).at[0, : b3.shape[0]].set(b3)
    return w2p, b2p, w3p, b3p


if __name__ == "__main__":
    key = jax.random.PRNGKey(0)
    pkey, xkey = jax.random.split(key)
    w2, b2, w3, b3 = init_params(pkey)
    w2p, b2p, w3p, b3p = pad_params(w2, b2, w3, b3)   # pre-padded, cached

    B = 8
    x = jax.random.normal(xkey, (B, 120), jnp.float32)

    out = f2_forward(x, w2p, b2p, w3p, b3p)
    jax.block_until_ready(out)

    # Cross-check against plain-JAX reference of the original (unpadded) MLP.
    ref = jnp.maximum(x @ w2 + b2[None, :], 0.0) @ w3 + b3[None, :]
    assert out.shape == (B, 10)
    assert jnp.allclose(out, ref, atol=1e-5, rtol=1e-5)

    print("KERNEL_OK")
</pallas_src>

<mosaic_0001>
module attributes {stable_mosaic.version = 11 : i64} {
  func.func @mlp_kernel(%arg0: i32, %arg1: memref<8x120xf32, #tpu.memory_space<vmem>>, %arg2: memref<120x128xf32, #tpu.memory_space<vmem>>, %arg3: memref<1x128xf32, #tpu.memory_space<vmem>>, %arg4: memref<128x128xf32, #tpu.memory_space<vmem>>, %arg5: memref<1x128xf32, #tpu.memory_space<vmem>>, %arg6: memref<8x128xf32, #tpu.memory_space<vmem>>) attributes {dimension_semantics = [#tpu.dimension_semantics<parallel>], iteration_bounds = array<i64: 1>, scalar_prefetch = 0 : i64, scratch_operands = 0 : i64, tpu.core_type = #tpu.core_type<tc>, window_params = [{transform_indices = @transform_0, window_bounds = array<i64: 8, 120>}, {pipeline_mode = #tpu.pipeline_mode<synchronous>, transform_indices = @transform_1, window_bounds = array<i64: 120, 128>}, {pipeline_mode = #tpu.pipeline_mode<synchronous>, transform_indices = @transform_2, window_bounds = array<i64: 1, 128>}, {pipeline_mode = #tpu.pipeline_mode<synchronous>, transform_indices = @transform_3, window_bounds = array<i64: 128, 128>}, {pipeline_mode = #tpu.pipeline_mode<synchronous>, transform_indices = @transform_4, window_bounds = array<i64: 1, 128>}, {transform_indices = @transform_5, window_bounds = array<i64: 8, 128>}]} {
    %c0 = arith.constant 0 : index
    %c0_0 = arith.constant 0 : index
    %0 = vector.load %arg1[%c0, %c0_0] : memref<8x120xf32, #tpu.memory_space<vmem>>, vector<8x120xf32>
    %c0_1 = arith.constant 0 : index
    %c0_2 = arith.constant 0 : index
    %1 = vector.load %arg2[%c0_1, %c0_2] : memref<120x128xf32, #tpu.memory_space<vmem>>, vector<120x128xf32>
    %cst = arith.constant dense<0.000000e+00> : vector<8x128xf32>
    %2 = tpu.matmul %0, %1, %cst {dimension_numbers = #tpu.dot_dimension_numbers<[1], [0], [0], [1], [0, 0, 1, 1], [], []>} : vector<8x120xf32>, vector<120x128xf32>, vector<8x128xf32> -> vector<8x128xf32>
    %c0_3 = arith.constant 0 : index
    %c0_4 = arith.constant 0 : index
    %3 = vector.load %arg3[%c0_3, %c0_4] : memref<1x128xf32, #tpu.memory_space<vmem>>, vector<1x128xf32>
    %4 = vector.broadcast %3 : vector<1x128xf32> to vector<8x128xf32>
    %5 = arith.addf %2, %4 : vector<8x128xf32>
    %cst_5 = arith.constant 0.000000e+00 : f32
    %6 = vector.broadcast %cst_5 : f32 to vector<8x128xf32>
    %7 = arith.maximumf %5, %6 : vector<8x128xf32>
    %c0_6 = arith.constant 0 : index
    %c0_7 = arith.constant 0 : index
    %8 = vector.load %arg4[%c0_6, %c0_7] : memref<128x128xf32, #tpu.memory_space<vmem>>, vector<128x128xf32>
    %cst_8 = arith.constant dense<0.000000e+00> : vector<8x128xf32>
    %9 = tpu.matmul %7, %8, %cst_8 {dimension_numbers = #tpu.dot_dimension_numbers<[1], [0], [0], [1], [0, 0, 1, 1], [], []>} : vector<8x128xf32>, vector<128x128xf32>, vector<8x128xf32> -> vector<8x128xf32>
    %c0_9 = arith.constant 0 : index
    %c0_10 = arith.constant 0 : index
    %10 = vector.load %arg5[%c0_9, %c0_10] : memref<1x128xf32, #tpu.memory_space<vmem>>, vector<1x128xf32>
    %11 = vector.broadcast %10 : vector<1x128xf32> to vector<8x128xf32>
    %12 = arith.addf %9, %11 : vector<8x128xf32>
    %c0_11 = arith.constant 0 : index
    %c0_12 = arith.constant 0 : index
    %13 = vector.load %arg6[%c0_11, %c0_12] : memref<8x128xf32, #tpu.memory_space<vmem>>, vector<8x128xf32>
    tpu.vector_store %arg6[%c0_11, %c0_12], %12 {strides = array<i32>} : memref<8x128xf32, #tpu.memory_space<vmem>>, vector<8x128xf32>,
    return
  }
  func.func @transform_0(%arg0: i32) -> (i32, i32) {
    %c0_i32 = arith.constant 0 : i32
    %c0_i32_0 = arith.constant 0 : i32
    return %arg0, %c0_i32 : i32, i32
  }
  func.func @transform_1(%arg0: i32) -> (i32, i32) {
    %c0_i32 = arith.constant 0 : i32
    %c0_i32_0 = arith.constant 0 : i32
    %c0_i32_1 = arith.constant 0 : i32
    return %c0_i32, %c0_i32_0 : i32, i32
  }
  func.func @transform_2(%arg0: i32) -> (i32, i32) {
    %c0_i32 = arith.constant 0 : i32
    %c0_i32_0 = arith.constant 0 : i32
    %c0_i32_1 = arith.constant 0 : i32
    return %c0_i32, %c0_i32_0 : i32, i32
  }
  func.func @transform_3(%arg0: i32) -> (i32, i32) {
    %c0_i32 = arith.constant 0 : i32
    %c0_i32_0 = arith.constant 0 : i32
    %c0_i32_1 = arith.constant 0 : i32
    return %c0_i32, %c0_i32_0 : i32, i32
  }
  func.func @transform_4(%arg0: i32) -> (i32, i32) {
    %c0_i32 = arith.constant 0 : i32
    %c0_i32_0 = arith.constant 0 : i32
    %c0_i32_1 = arith.constant 0 : i32
    return %c0_i32, %c0_i32_0 : i32, i32
  }
  func.func @transform_5(%arg0: i32) -> (i32, i32) {
    %c0_i32 = arith.constant 0 : i32
    %c0_i32_0 = arith.constant 0 : i32
    return %arg0, %c0_i32 : i32, i32
  }
}

</mosaic_0001>

<llo_original>
// kernel: tpu_custom_call.1
$region0: #{tpu_custom_call.1}
  #allocation0 [shape = 'u32[]', space=smem, size = 0x4, offset = 0x4, fixed_abs, tag = 'smem constant byte address 0x4 - core index']
  #allocation1 [shape = 'u32[144,128]{1,0:T(1,128)}', space=vmem, size = 0x12000, scoped, tag = 'internal scratch']
  %s0 = inlined_call_operand.hbm [shape: f32[8,120], index: 0, kind: input, shape index: {}]
  %s1 = inlined_call_operand.hbm [shape: f32[120,128], index: 1, kind: input, shape index: {}]
  %s2 = inlined_call_operand.vmem [shape: f32[1,128], index: 2, kind: input, shape index: {}]
  %s3 = inlined_call_operand.hbm [shape: f32[128,128], index: 3, kind: input, shape index: {}]
  %s4 = inlined_call_operand.vmem [shape: f32[1,128], index: 4, kind: input, shape index: {}]
  %s5 = inlined_call_operand.hbm [shape: f32[8,128], index: 5, kind: output, shape index: {}]
  %s6 = sld [smem:[#allocation0]]
  $region42: #{tpu_custom_call.1} parent=0
    _
  %s8 = ssub.s32 1, %s6
  %s9 = scalar_select 0, %s8, %s6
  $region1: #{tpu_custom_call.1} parent=0
    #allocation2 [shape = 'u8[4096]{0}', space=vmem, size = 0x1000, scoped, tag = 'input window, operand 0, single buffered']
    #allocation3 [shape = 's32[1]{0}', space=sflag, size = 0x4, scoped, tag = 'scoped memory for tpu_custom_call.1']
    #allocation4 [shape = 's32[1]{0}', space=sflag, size = 0x4, scoped, tag = 'scoped memory for tpu_custom_call.1']
    #allocation5 [shape = 'u8[61440]{0}', space=vmem, size = 0xf000, scoped, tag = 'input window, operand 1, single buffered']
    #allocation6 [shape = 's32[1]{0}', space=sflag, size = 0x4, scoped, tag = 'scoped memory for tpu_custom_call.1']
    #allocation7 [shape = 'u8[65536]{0}', space=vmem, size = 0x10000, scoped, tag = 'input window, operand 3, single buffered']
    #allocation8 [shape = 'u8[4096]{0}', space=vmem, size = 0x1000, scoped, tag = 'output window, operand 0, single buffered']
    %10 = vsyncpa [#allocation3], 0
    %11 = vsyncpa [#allocation6], 0
    %12 = vsyncpa [#allocation4], 0
    // Predicated region
    $region2: #{tpu_custom_call.1} parent=1 // pred_check
      _
    $region3: #{tpu_custom_call.1} parent=1 // pred_check_branch
      %14 = sbr.rel (0) target = $region5
    $region4: #{tpu_custom_call.1} parent=1 // pred_region
      %s16 = ssub.s32 128, 128
      %17 = vsyncadd [#allocation3], %s16
      %s19 = sshll.u32 [#allocation2], 4
      %s20 = int_to_ptr.vmem [resolvable:$true] %s19
      %22 = dma.hbm_to_vmem [thread:$0]  %s0, 128, %s20, [#allocation3]
    $region5: #{tpu_custom_call.1} parent=1 // pred_fallthru
      _
    // Predicated region
    $region6: #{tpu_custom_call.1} parent=1 // pred_check
      _
    $region7: #{tpu_custom_call.1} parent=1 // pred_check_branch
      %24 = sbr.rel (0) target = $region9
    $region8: #{tpu_custom_call.1} parent=1 // pred_region
      %s26 = ssub.s32 1920, 1920
      %27 = vsyncadd [#allocation6], %s26
      %s28 = sshll.u32 [#allocation5], 4
      %s29 = int_to_ptr.vmem [resolvable:$true] %s28
      %34 = dma.hbm_to_vmem [thread:$0]  %s1, 1920, %s29, [#allocation6], 128, 128, 8
    $region9: #{tpu_custom_call.1} parent=1 // pred_fallthru
      _
    // Predicated region
    $region10: #{tpu_custom_call.1} parent=1 // pred_check
      _
    $region11: #{tpu_custom_call.1} parent=1 // pred_check_branch
      %36 = sbr.rel (0) target = $region13
    $region12: #{tpu_custom_call.1} parent=1 // pred_region
      _
    $region13: #{tpu_custom_call.1} parent=1 // pred_fallthru
      _
    // Predicated region
    $region14: #{tpu_custom_call.1} parent=1 // pred_check
      _
    $region15: #{tpu_custom_call.1} parent=1 // pred_check_branch
      %38 = sbr.rel (0) target = $region17
    $region16: #{tpu_custom_call.1} parent=1 // pred_region
      %s40 = ssub.s32 2048, 2048
      %41 = vsyncadd [#allocation6], %s40
      %s42 = sshll.u32 [#allocation7], 4
      %s43 = int_to_ptr.vmem [resolvable:$true] %s42
      %48 = dma.hbm_to_vmem [thread:$0]  %s3, 2048, %s43, [#allocation6], 128, 128, 8
    $region17: #{tpu_custom_call.1} parent=1 // pred_fallthru
      _
    // Predicated region
    $region18: #{tpu_custom_call.1} parent=1 // pred_check
      _
    $region19: #{tpu_custom_call.1} parent=1 // pred_check_branch
      %50 = sbr.rel (0) target = $region21
    $region20: #{tpu_custom_call.1} parent=1 // pred_region
      _
    $region21: #{tpu_custom_call.1} parent=1 // pred_fallthru
      _
    // Predicated region
    $region22: #{tpu_custom_call.1} parent=1 // pred_check
      _
    $region23: #{tpu_custom_call.1} parent=1 // pred_check_branch
      %52 = sbr.rel (0) target = $region25
    $region24: #{tpu_custom_call.1} parent=1 // pred_region
      %53 = dma.done [#allocation3], 128
    $region25: #{tpu_custom_call.1} parent=1 // pred_fallthru
      _
    // Predicated region
    $region26: #{tpu_custom_call.1} parent=1 // pred_check
      _
    $region27: #{tpu_custom_call.1} parent=1 // pred_check_branch
      %55 = sbr.rel (0) target = $region29
    $region28: #{tpu_custom_call.1} parent=1 // pred_region
      %56 = dma.done [#allocation6], 1920
    $region29: #{tpu_custom_call.1} parent=1 // pred_fallthru
      _
    // Predicated region
    $region30: #{tpu_custom_call.1} parent=1 // pred_check
      _
    $region31: #{tpu_custom_call.1} parent=1 // pred_check_branch
      %58 = sbr.rel (0) target = $region33
    $region32: #{tpu_custom_call.1} parent=1 // pred_region
      %59 = dma.done [#allocation6], 2048
    $region33: #{tpu_custom_call.1} parent=1 // pred_fallthru
      _
    %v60 = vld [vmem:[#allocation2] sm:$0xff]
    %v61 = vld [vmem:[#allocation5] sm:$0xff]
    %v62 = vld [vmem:[#allocation5 + $0x8] sm:$0xff]
    %v63 = vld [vmem:[#allocation5 + $0x10] sm:$0xff]
    %v64 = vld [vmem:[#allocation5 + $0x18] sm:$0xff]
    %v65 = vld [vmem:[#allocation5 + $0x20] sm:$0xff]
    %v66 = vld [vmem:[#allocation5 + $0x28] sm:$0xff]
    %v67 = vld [vmem:[#allocation5 + $0x30] sm:$0xff]
    %v68 = vld [vmem:[#allocation5 + $0x38] sm:$0xff]
    %v69 = vld [vmem:[#allocation5 + $0x40] sm:$0xff]
    %v70 = vld [vmem:[#allocation5 + $0x48] sm:$0xff]
    %v71 = vld [vmem:[#allocation5 + $0x50] sm:$0xff]
    %v72 = vld [vmem:[#allocation5 + $0x58] sm:$0xff]
    %v73 = vld [vmem:[#allocation5 + $0x60] sm:$0xff]
    %v74 = vld [vmem:[#allocation5 + $0x68] sm:$0xff]
    %v75 = vld [vmem:[#allocation5 + $0x70] sm:$0xff]
    %v76 = vld [vmem:[%s2] sm:$0x1]
    %v78 = vlaneseq
    %v79 = vshrl.u32 %v78, 7
    %v80 = vsub.s32 0, %v79
    %v81 = vrot.slane %v76, %v80
    %vm83 = vcmask 982016
    %v85 = vsel %vm83, %v60, 0
    %87 = vmatprep.subr.mxu0 0.0
    %88 = vmatpush1.msra.mxu0 %v61
    %89 = vmatprep.subr.mxu0 0.0
    %90 = vmatpush1.msra.mxu0 %v62
    %91 = vmatprep.subr.mxu0 0.0
    %92 = vmatpush1.msra.mxu0 %v63
    %93 = vmatprep.subr.mxu0 0.0
    %94 = vmatpush1.msra.mxu0 %v64
    %95 = vmatprep.subr.mxu0 0.0
    %96 = vmatpush1.msra.mxu0 %v65
    %97 = vmatprep.subr.mxu0 0.0
    %98 = vmatpush1.msra.mxu0 %v66
    %99 = vmatprep.subr.mxu0 0.0
    %100 = vmatpush1.msra.mxu0 %v67
    %101 = vmatprep.subr.mxu0 0.0
    %102 = vmatpush1.msra.mxu0 %v68
    %103 = vmatprep.subr.mxu0 0.0
    %104 = vmatpush1.msra.mxu0 %v69
    %105 = vmatprep.subr.mxu0 0.0
    %106 = vmatpush1.msra.mxu0 %v70
    %107 = vmatprep.subr.mxu0 0.0
    %108 = vmatpush1.msra.mxu0 %v71
    %109 = vmatprep.subr.mxu0 0.0
    %110 = vmatpush1.msra.mxu0 %v72
    %111 = vmatprep.subr.mxu0 0.0
    %112 = vmatpush1.msra.mxu0 %v73
    %113 = vmatprep.subr.mxu0 0.0
    %114 = vmatpush1.msra.mxu0 %v74
    %115 = vmatprep.subr.mxu0 0.0
    %116 = vmatpush1.msra.mxu0 %v75
    %117 = vmatprep.subr.mxu0 0.0
    %118 = vmatpush1.msra.mxu0 0.0
    %119 = vmatprep.subr.mxu0 0.0
    %120 = vmatpush1.msra.mxu0 0.0
    %121 = vmatprep.subr.mxu0 0.0
    %122 = vmatpush1.msra.mxu0 0.0
    %123 = vmatprep.subr.mxu0 0.0
    %124 = vmatpush1.msra.mxu0 0.0
    %125 = vmatprep.subr.mxu0 0.0
    %126 = vmatpush1.msra.mxu0 0.0
    %127 = vmatprep.subr.mxu0 0.0
    %128 = vmatpush1.msra.mxu0 0.0
    %129 = vmatprep.subr.mxu0 0.0
    %130 = vmatpush1.msra.mxu0 0.0
    %131 = vmatprep.subr.mxu0 0.0
    %132 = vmatpush1.msra.mxu0 0.0
    %133 = vmatprep.subr.mxu0 0.0
    %134 = vmatpush1.msra.mxu0 0.0
    %135 = vmatprep.subr.mxu0 0.0
    %136 = vmatpush1.msra.mxu0 0.0
    %137 = vmatprep.subr.mxu0 0.0
    %138 = vmatpush1.msra.mxu0 0.0
    %139 = vmatprep.subr.mxu0 0.0
    %140 = vmatpush1.msra.mxu0 0.0
    %141 = vmatprep.subr.mxu0 0.0
    %142 = vmatpush1.msra.mxu0 0.0
    %143 = vmatprep.subr.mxu0 0.0
    %144 = vmatpush1.msra.mxu0 0.0
    %145 = vmatprep.subr.mxu0 0.0
    %146 = vmatpush1.msra.mxu0 0.0
    %147 = vmatprep.subr.mxu0 0.0
    %148 = vmatpush1.msra.mxu0 0.0
    %149 = vmatprep.subr.mxu0 0.0
    %150 = vmatpush1.msra.mxu0 0.0
    %151 = vmatprep.mubr.f32.mxu0 0.0
    %152 = vmatmul.mubr.f32.gmra.mrb[0].mxu0 %v85
    %v153 = vpop.f32.mrb[0].mxu0
    %v154 = vadd.f32 %v81, %v153
    %v155 = vpop.f32.mrb[0].mxu0
    %156 = vdwg.mxu0
    %v157 = vmax.f32 %v154, 0.0
    %v158 = vld [vmem:[#allocation7] sm:$0xff]
    %v159 = vld [vmem:[#allocation7 + $0x8] sm:$0xff]
    %v160 = vld [vmem:[#allocation7 + $0x10] sm:$0xff]
    %v161 = vld [vmem:[#allocation7 + $0x18] sm:$0xff]
    %v162 = vld [vmem:[#allocation7 + $0x20] sm:$0xff]
    %v163 = vld [vmem:[#allocation7 + $0x28] sm:$0xff]
    %v164 = vld [vmem:[#allocation7 + $0x30] sm:$0xff]
    %v165 = vld [vmem:[#allocation7 + $0x38] sm:$0xff]
    %v166 = vld [vmem:[#allocation7 + $0x40] sm:$0xff]
    %v167 = vld [vmem:[#allocation7 + $0x48] sm:$0xff]
    %v168 = vld [vmem:[#allocation7 + $0x50] sm:$0xff]
    %v169 = vld [vmem:[#allocation7 + $0x58] sm:$0xff]
    %v170 = vld [vmem:[#allocation7 + $0x60] sm:$0xff]
    %v171 = vld [vmem:[#allocation7 + $0x68] sm:$0xff]
    %v172 = vld [vmem:[#allocation7 + $0x70] sm:$0xff]
    %v173 = vld [vmem:[#allocation7 + $0x78] sm:$0xff]
    %v174 = vld [vmem:[%s4] sm:$0x1]
    %v176 = vlaneseq
    %v177 = vshrl.u32 %v176, 7
    %v178 = vsub.s32 0, %v177
    %v179 = vrot.slane %v174, %v178
    %181 = vmatprep.subr.mxu0 0.0
    %182 = vmatpush1.msra.mxu0 %v158
    %183 = vmatprep.subr.mxu0 0.0
    %184 = vmatpush1.msra.mxu0 %v159
    %185 = vmatprep.subr.mxu0 0.0
    %186 = vmatpush1.msra.mxu0 %v160
    %187 = vmatprep.subr.mxu0 0.0
    %188 = vmatpush1.msra.mxu0 %v161
    %189 = vmatprep.subr.mxu0 0.0
    %190 = vmatpush1.msra.mxu0 %v162
    %191 = vmatprep.subr.mxu0 0.0
    %192 = vmatpush1.msra.mxu0 %v163
    %193 = vmatprep.subr.mxu0 0.0
    %194 = vmatpush1.msra.mxu0 %v164
    %195 = vmatprep.subr.mxu0 0.0
    %196 = vmatpush1.msra.mxu0 %v165
    %197 = vmatprep.subr.mxu0 0.0
    %198 = vmatpush1.msra.mxu0 %v166
    %199 = vmatprep.subr.mxu0 0.0
    %200 = vmatpush1.msra.mxu0 %v167
    %201 = vmatprep.subr.mxu0 0.0
    %202 = vmatpush1.msra.mxu0 %v168
    %203 = vmatprep.subr.mxu0 0.0
    %204 = vmatpush1.msra.mxu0 %v169
    %205 = vmatprep.subr.mxu0 0.0
    %206 = vmatpush1.msra.mxu0 %v170
    %207 = vmatprep.subr.mxu0 0.0
    %208 = vmatpush1.msra.mxu0 %v171
    %209 = vmatprep.subr.mxu0 0.0
    %210 = vmatpush1.msra.mxu0 %v172
    %211 = vmatprep.subr.mxu0 0.0
    %212 = vmatpush1.msra.mxu0 %v173
    %213 = vmatprep.subr.mxu0 0.0
    %214 = vmatpush1.msra.mxu0 0.0
    %215 = vmatprep.subr.mxu0 0.0
    %216 = vmatpush1.msra.mxu0 0.0
    %217 = vmatprep.subr.mxu0 0.0
    %218 = vmatpush1.msra.mxu0 0.0
    %219 = vmatprep.subr.mxu0 0.0
    %220 = vmatpush1.msra.mxu0 0.0
    %221 = vmatprep.subr.mxu0 0.0
    %222 = vmatpush1.msra.mxu0 0.0
    %223 = vmatprep.subr.mxu0 0.0
    %224 = vmatpush1.msra.mxu0 0.0
    %225 = vmatprep.subr.mxu0 0.0
    %226 = vmatpush1.msra.mxu0 0.0
    %227 = vmatprep.subr.mxu0 0.0
    %228 = vmatpush1.msra.mxu0 0.0
    %229 = vmatprep.subr.mxu0 0.0
    %230 = vmatpush1.msra.mxu0 0.0
    %231 = vmatprep.subr.mxu0 0.0
    %232 = vmatpush1.msra.mxu0 0.0
    %233 = vmatprep.subr.mxu0 0.0
    %234 = vmatpush1.msra.mxu0 0.0
    %235 = vmatprep.subr.mxu0 0.0
    %236 = vmatpush1.msra.mxu0 0.0
    %237 = vmatprep.subr.mxu0 0.0
    %238 = vmatpush1.msra.mxu0 0.0
    %239 = vmatprep.subr.mxu0 0.0
    %240 = vmatpush1.msra.mxu0 0.0
    %241 = vmatprep.subr.mxu0 0.0
    %242 = vmatpush1.msra.mxu0 0.0
    %243 = vmatprep.subr.mxu0 0.0
    %244 = vmatpush1.msra.mxu0 0.0
    %245 = vmatprep.mubr.f32.mxu0 0.0
    %246 = vmatmul.mubr.f32.gmra.mrb[0].mxu0 %v157
    %v247 = vpop.f32.mrb[0].mxu0
    %v248 = vadd.f32 %v179, %v247
    %v249 = vpop.f32.mrb[0].mxu0
    %250 = vdwg.mxu0
    %251 = vst [vmem:[#allocation8] sm:$0xff] %v248
    // Predicated region
    $region34: #{tpu_custom_call.1} parent=1 // pred_check
      _
    $region35: #{tpu_custom_call.1} parent=1 // pred_check_branch
      %253 = sbr.rel (0) target = $region37
    $region36: #{tpu_custom_call.1} parent=1 // pred_region
      %s255 = ssub.s32 128, 128
      %256 = vsyncadd [#allocation4], %s255
      %s258 = sshll.u32 [#allocation8], 4
      %s259 = int_to_ptr.vmem [resolvable:$true] %s258
      %261 = dma.vmem_to_hbm [thread:$0]  %s259, 128, %s5, [#allocation4]
    $region37: #{tpu_custom_call.1} parent=1 // pred_fallthru
      _
    // Predicated region
    $region38: #{tpu_custom_call.1} parent=1 // pred_check
      _
    $region39: #{tpu_custom_call.1} parent=1 // pred_check_branch
      %263 = sbr.rel (0) target = $region41
    $region40: #{tpu_custom_call.1} parent=1 // pred_region
      %264 = dma.done [#allocation4], 128
    $region41: #{tpu_custom_call.1} parent=1 // pred_fallthru
      _
    %265 = vsyncpa [#allocation3], 1
    %266 = vsyncpa [#allocation6], 1
    %267 = vsyncpa [#allocation4], 1

</llo_original>
